<compile_context>
chip_gen: v6e
topology: v6e:2x2x1
jax: 0.10.0
libtpu: 0.0.40
codegen_flags: <defaults>
</compile_context>

<pallas_src>
import functools

import jax
import jax.numpy as jnp
from jax import lax
from jax.experimental import pallas as pl
from jax.experimental.pallas import tpu as pltpu


def _round_up(x: int, m: int) -> int:
    return (x + m - 1) // m * m


def _qmix_kernel(s_ref, qT_ref, w1T_ref, b1c_ref, w2T_ref, b2c_ref, out_ref,
                 *, hidden_size: int):
    """Fused QMIX mixing network on one batch tile (batch on lanes)."""
    H3 = 3 * hidden_size

    # states tile arrives untransposed [TB, S]; cast to bf16 for the MXU and
    # contract the minor dims of both operands (A @ B^T) -> no transpose.
    s_b = s_ref[...].astype(jnp.bfloat16)                 # [TB, S]  bf16
    qT = qT_ref[...]                                      # [3, TB]  f32

    # --- fused first hypernet layer: [3H+1, S] @ [TB, S]^T + [3H+1, 1] ---
    # rows 0:H   -> hyper_w1 hidden, rows H:2H -> hyper_w2 hidden,
    # rows 2H:3H -> hyper_b2 hidden, row  3H   -> hyper_b1 output (b1).
    z = lax.dot_general(
        w1T_ref[...], s_b,
        dimension_numbers=(((1,), (1,)), ((), ())),
        preferred_element_type=jnp.float32) + b1c_ref[...]     # [3H+1, TB] f32
    b1 = z[H3:H3 + 1, :]                                  # [1, TB] pre-ReLU row
    h = jnp.maximum(z, 0.0).astype(jnp.bfloat16)          # [3H+1, TB] bf16

    # --- fused block-diagonal second layer: [5, 3H+1] @ [3H+1, TB] + [5, 1] ---
    # rows 0:3 -> hyper_w1 out, row 3 -> hyper_w2 out, row 4 -> hyper_b2 out.
    # (zero last column kills the relu'd hyper_b1 row of the fused hidden.)
    y = jnp.dot(w2T_ref[...], h,
                preferred_element_type=jnp.float32) + b2c_ref[...]   # [5, TB] f32
    w1 = jnp.abs(y[0:3, :])                               # [3, TB]
    w2 = jnp.abs(y[3:4, :])                               # [1, TB]
    b2 = y[4:5, :]                                        # [1, TB]

    # --- monotonic mix (f32 epilogue, lane-dense output row) ---
    wq = w1 * qT
    mix = wq[0:1, :] + wq[1:2, :] + wq[2:3, :]            # [1, TB]
    hidden = jnp.maximum(mix + b1, 0.0)                   # [1, TB]
    out_ref[...] = (w2 * hidden + b2).astype(out_ref.dtype)


def init_qmix_params(key, state_dim, hidden_size=64, dtype=jnp.float32):
    """PyTorch-Linear-style init: U(-1/sqrt(fan_in), 1/sqrt(fan_in)).

    Weights stored as (in_dim, out_dim) so the math is x @ W + b.
    """
    def linear(k, fan_in, fan_out):
        kw, kb = jax.random.split(k)
        bound = 1.0 / jnp.sqrt(jnp.asarray(fan_in, dtype))
        w = jax.random.uniform(kw, (fan_in, fan_out), dtype, -bound, bound)
        b = jax.random.uniform(kb, (1, fan_out), dtype, -bound, bound)
        return w, b

    keys = jax.random.split(key, 7)
    p = {}
    p["w1a"], p["b1a"] = linear(keys[0], state_dim, hidden_size)    # hyper_w1[0]
    p["w1b"], p["b1b"] = linear(keys[1], hidden_size, 3)            # hyper_w1[2]
    p["w2a"], p["b2a"] = linear(keys[2], state_dim, hidden_size)    # hyper_w2[0]
    p["w2b"], p["b2b"] = linear(keys[3], hidden_size, 1)            # hyper_w2[2]
    p["wb1"], p["bb1"] = linear(keys[4], state_dim, 1)              # hyper_b1
    p["wb2a"], p["bb2a"] = linear(keys[5], state_dim, hidden_size)  # hyper_b2[0]
    p["wb2b"], p["bb2b"] = linear(keys[6], hidden_size, 1)          # hyper_b2[2]
    return p


def _fuse_params(params):
    """Build the fused weights consumed by the kernel (matmul weights in bf16)."""
    H = params["w1a"].shape[1]
    dt = params["w1a"].dtype

    # Fused first layer: [3H+1, S] rows = [w1a | w2a | wb2a | wb1] (transposed).
    W1T = jnp.concatenate(
        [params["w1a"].T, params["w2a"].T, params["wb2a"].T, params["wb1"].T], axis=0)
    b1c = jnp.concatenate(
        [params["b1a"].T, params["b2a"].T, params["bb2a"].T, params["bb1"].T], axis=0)

    # Fused block-diagonal second layer: [5, 3H+1].
    z = lambda r: jnp.zeros((r, H), dt)
    row_w1 = jnp.concatenate([params["w1b"].T, z(3), z(3)], axis=1)   # [3, 3H]
    row_w2 = jnp.concatenate([z(1), params["w2b"].T, z(1)], axis=1)   # [1, 3H]
    row_b2 = jnp.concatenate([z(1), z(1), params["wb2b"].T], axis=1)  # [1, 3H]
    W2T = jnp.concatenate([row_w1, row_w2, row_b2], axis=0)           # [5, 3H]
    W2T = jnp.concatenate([W2T, jnp.zeros((5, 1), dt)], axis=1)       # [5, 3H+1]
    b2c = jnp.concatenate(
        [params["b1b"].T, params["b2b"].T, params["bb2b"].T], axis=0)  # [5, 1]

    # MXU operands in bf16; bias columns stay f32 (added to the f32 accumulators).
    return (W1T.astype(jnp.bfloat16), b1c.astype(jnp.float32),
            W2T.astype(jnp.bfloat16), b2c.astype(jnp.float32))


def _pick_batch_tile(B: int, batch_tile: int) -> int:
    if B < 128:
        return B                      # single full-array block (lane dim == B)
    # >=128, multiple of 128, capped so the grid has >=2 steps when B > 128
    # (v7x: two TensorCores share the "parallel" batch axis).
    tb = min(int(batch_tile), _round_up(pl.cdiv(B, 2), 128))
    return max(128, _round_up(tb, 128))


@functools.partial(jax.jit, static_argnames=("batch_tile",))
def qmix_forward(agent_q_values, states, params, batch_tile=2048):
    """QMIX mixing network.  agent_q_values: [B, 3], states: [B, S] -> [B, 1]."""
    B, S = states.shape
    assert agent_q_values.shape == (B, 3)
    H = params["w1a"].shape[1]

    TB = _pick_batch_tile(B, batch_tile)
    grid = (pl.cdiv(B, TB),)

    # Only the tiny [B, 3] q tensor is transposed on the host side (negligible);
    # states stay untransposed & unpadded, out-of-range lanes of the last block
    # are masked on write by Pallas.
    qT = agent_q_values.T                                  # [3, B]

    W1T, b1c, W2T, b2c = _fuse_params(params)

    def full_spec(shape):
        return pl.BlockSpec(shape, lambda i: (0, 0))       # grid-invariant, stays resident

    n_steps = grid[0]
    Bc = n_steps * TB
    flops = 2 * Bc * (S * (3 * H + 1) + (3 * H + 1) * 5) + 16 * Bc
    bytes_accessed = (4 * Bc * (S + 3 + 1)
                      + 2 * ((3 * H + 1) * S + 5 * (3 * H + 1))
                      + 4 * ((3 * H + 1) + 5))

    out = pl.pallas_call(
        functools.partial(_qmix_kernel, hidden_size=H),
        out_shape=jax.ShapeDtypeStruct((1, B), states.dtype),
        grid=grid,
        in_specs=[
            pl.BlockSpec((TB, S), lambda i: (i, 0)),        # states tile [TB, S]
            pl.BlockSpec((3, TB), lambda i: (0, i)),        # q^T tile    [3, TB]
            full_spec(W1T.shape),                           # fused first-layer weight (bf16)
            full_spec(b1c.shape),                           # fused first-layer bias column
            full_spec(W2T.shape),                           # fused block-diag second layer (bf16)
            full_spec(b2c.shape),                           # fused second-layer bias column
        ],
        out_specs=pl.BlockSpec((1, TB), lambda i: (0, i)),  # lane-dense q_total row
        compiler_params=pltpu.CompilerParams(
            dimension_semantics=("parallel",),
        ),
        cost_estimate=pl.CostEstimate(
            flops=flops, transcendentals=0, bytes_accessed=bytes_accessed),
    )(states, qT, W1T, b1c, W2T, b2c)

    return out.reshape(B, 1)


def qmix_reference(agent_q_values, states, params, cast=lambda x: x):
    """Pure-JAX reference mirroring the PyTorch forward.

    `cast` lets the test emulate the kernel's bf16 matmul operands exactly.
    """
    c = cast

    def mlp(x, w_a, b_a, w_b, b_b):
        hid = jnp.maximum(c(x) @ c(w_a) + b_a, 0.0)
        return c(hid) @ c(w_b) + b_b

    w1 = jnp.abs(mlp(states, params["w1a"], params["b1a"], params["w1b"], params["b1b"]))
    b1 = c(states) @ c(params["wb1"]) + params["bb1"]
    hidden = jnp.maximum(jnp.sum(w1 * agent_q_values, axis=-1, keepdims=True) + b1, 0.0)
    w2 = jnp.abs(mlp(states, params["w2a"], params["b2a"], params["w2b"], params["b2b"]))
    b2 = mlp(states, params["wb2a"], params["bb2a"], params["wb2b"], params["bb2b"])
    return w2 * hidden + b2


if __name__ == "__main__":
    B, STATE_DIM, HIDDEN = 8, 32, 64

    key = jax.random.PRNGKey(0)
    k_params, k_q, k_s, k_q2, k_s2 = jax.random.split(key, 5)

    params = init_qmix_params(k_params, STATE_DIM, HIDDEN)
    agent_q = jax.random.normal(k_q, (B, 3), jnp.float32)
    states = jax.random.normal(k_s, (B, STATE_DIM), jnp.float32)

    bf16_rt = lambda x: x.astype(jnp.bfloat16).astype(jnp.float32)

    out = jax.block_until_ready(qmix_forward(agent_q, states, params))
    ref_bf16 = qmix_reference(agent_q, states, params, cast=bf16_rt)
    ref_f32 = qmix_reference(agent_q, states, params)
    assert out.shape == (B, 1)
    # Exact-arithmetic check against a reference using the same bf16 MXU operands.
    assert jnp.allclose(out, ref_bf16, atol=2e-3, rtol=2e-3), (out, ref_bf16)
    # Sanity check against the full-f32 reference (bf16 operand precision).
    assert jnp.allclose(out, ref_f32, atol=2e-1, rtol=5e-2), (out, ref_f32)

    # Second case: batch not a multiple of the tile + multi-step grid
    # (exercises the partial last block and >1 "parallel" grid steps).
    B2 = 300
    agent_q2 = jax.random.normal(k_q2, (B2, 3), jnp.float32)
    states2 = jax.random.normal(k_s2, (B2, STATE_DIM), jnp.float32)
    out2 = jax.block_until_ready(qmix_forward(agent_q2, states2, params, batch_tile=128))
    ref2_bf16 = qmix_reference(agent_q2, states2, params, cast=bf16_rt)
    ref2_f32 = qmix_reference(agent_q2, states2, params)
    assert out2.shape == (B2, 1)
    assert jnp.allclose(out2, ref2_bf16, atol=2e-3, rtol=2e-3), (out2, ref2_bf16)
    assert jnp.allclose(out2, ref2_f32, atol=2e-1, rtol=5e-2), (out2, ref2_f32)

    print("KERNEL_OK")
</pallas_src>

<mosaic_0001>
module attributes {stable_mosaic.version = 11 : i64} {
  func.func @_qmix_kernel(%arg0: i32, %arg1: memref<8x32xf32, #tpu.memory_space<vmem>>, %arg2: memref<3x8xf32, #tpu.memory_space<vmem>>, %arg3: memref<193x32xbf16, #tpu.memory_space<vmem>>, %arg4: memref<193x1xf32, #tpu.memory_space<vmem>>, %arg5: memref<5x193xbf16, #tpu.memory_space<vmem>>, %arg6: memref<5x1xf32, #tpu.memory_space<vmem>>, %arg7: memref<1x8xf32, #tpu.memory_space<vmem>>) attributes {dimension_semantics = [#tpu.dimension_semantics<parallel>], iteration_bounds = array<i64: 1>, scalar_prefetch = 0 : i64, scratch_operands = 0 : i64, tpu.core_type = #tpu.core_type<tc>, window_params = [{transform_indices = @transform_0, window_bounds = array<i64: 8, 32>}, {transform_indices = @transform_1, window_bounds = array<i64: 3, 8>}, {pipeline_mode = #tpu.pipeline_mode<synchronous>, transform_indices = @transform_2, window_bounds = array<i64: 193, 32>}, {pipeline_mode = #tpu.pipeline_mode<synchronous>, transform_indices = @transform_3, window_bounds = array<i64: 193, 1>}, {pipeline_mode = #tpu.pipeline_mode<synchronous>, transform_indices = @transform_4, window_bounds = array<i64: 5, 193>}, {pipeline_mode = #tpu.pipeline_mode<synchronous>, transform_indices = @transform_5, window_bounds = array<i64: 5, 1>}, {transform_indices = @transform_6, window_bounds = array<i64: 1, 8>}]} {
    %c0 = arith.constant 0 : index
    %c0_0 = arith.constant 0 : index
    %0 = vector.load %arg1[%c0, %c0_0] : memref<8x32xf32, #tpu.memory_space<vmem>>, vector<8x32xf32>
    %1 = arith.truncf %0 : vector<8x32xf32> to vector<8x32xbf16>
    %c0_1 = arith.constant 0 : index
    %c0_2 = arith.constant 0 : index
    %2 = vector.load %arg2[%c0_1, %c0_2] : memref<3x8xf32, #tpu.memory_space<vmem>>, vector<3x8xf32>
    %c0_3 = arith.constant 0 : index
    %c0_4 = arith.constant 0 : index
    %3 = vector.load %arg3[%c0_3, %c0_4] : memref<193x32xbf16, #tpu.memory_space<vmem>>, vector<193x32xbf16>
    %cst = arith.constant dense<0.000000e+00> : vector<193x8xf32>
    %4 = tpu.matmul %3, %1, %cst {dimension_numbers = #tpu.dot_dimension_numbers<[1], [1], [0], [0], [0, 0, 1, 0], [], []>} : vector<193x32xbf16>, vector<8x32xbf16>, vector<193x8xf32> -> vector<193x8xf32>
    %c0_5 = arith.constant 0 : index
    %c0_6 = arith.constant 0 : index
    %5 = vector.load %arg4[%c0_5, %c0_6] : memref<193x1xf32, #tpu.memory_space<vmem>>, vector<193x1xf32>
    %6 = vector.broadcast %5 : vector<193x1xf32> to vector<193x8xf32>
    %7 = arith.addf %4, %6 : vector<193x8xf32>
    %8 = vector.extract_strided_slice %7 {offsets = [192, 0], sizes = [1, 8], strides = [1, 1]} : vector<193x8xf32> to vector<1x8xf32>
    %cst_7 = arith.constant 0.000000e+00 : f32
    %9 = vector.broadcast %cst_7 : f32 to vector<193x8xf32>
    %10 = arith.maximumf %7, %9 : vector<193x8xf32>
    %11 = arith.truncf %10 : vector<193x8xf32> to vector<193x8xbf16>
    %c0_8 = arith.constant 0 : index
    %c0_9 = arith.constant 0 : index
    %12 = vector.load %arg5[%c0_8, %c0_9] : memref<5x193xbf16, #tpu.memory_space<vmem>>, vector<5x193xbf16>
    %cst_10 = arith.constant dense<0.000000e+00> : vector<5x8xf32>
    %13 = tpu.matmul %12, %11, %cst_10 {dimension_numbers = #tpu.dot_dimension_numbers<[1], [0], [0], [1], [0, 0, 1, 1], [], []>} : vector<5x193xbf16>, vector<193x8xbf16>, vector<5x8xf32> -> vector<5x8xf32>
    %c0_11 = arith.constant 0 : index
    %c0_12 = arith.constant 0 : index
    %14 = vector.load %arg6[%c0_11, %c0_12] : memref<5x1xf32, #tpu.memory_space<vmem>>, vector<5x1xf32>
    %15 = vector.broadcast %14 : vector<5x1xf32> to vector<5x8xf32>
    %16 = arith.addf %13, %15 : vector<5x8xf32>
    %17 = vector.extract_strided_slice %16 {offsets = [0, 0], sizes = [3, 8], strides = [1, 1]} : vector<5x8xf32> to vector<3x8xf32>
    %18 = math.absf %17 : vector<3x8xf32>
    %19 = vector.extract_strided_slice %16 {offsets = [3, 0], sizes = [1, 8], strides = [1, 1]} : vector<5x8xf32> to vector<1x8xf32>
    %20 = math.absf %19 : vector<1x8xf32>
    %21 = vector.extract_strided_slice %16 {offsets = [4, 0], sizes = [1, 8], strides = [1, 1]} : vector<5x8xf32> to vector<1x8xf32>
    %22 = arith.mulf %18, %2 : vector<3x8xf32>
    %23 = vector.extract_strided_slice %22 {offsets = [0, 0], sizes = [1, 8], strides = [1, 1]} : vector<3x8xf32> to vector<1x8xf32>
    %24 = vector.extract_strided_slice %22 {offsets = [1, 0], sizes = [1, 8], strides = [1, 1]} : vector<3x8xf32> to vector<1x8xf32>
    %25 = arith.addf %23, %24 : vector<1x8xf32>
    %26 = vector.extract_strided_slice %22 {offsets = [2, 0], sizes = [1, 8], strides = [1, 1]} : vector<3x8xf32> to vector<1x8xf32>
    %27 = arith.addf %25, %26 : vector<1x8xf32>
    %28 = arith.addf %27, %8 : vector<1x8xf32>
    %cst_13 = arith.constant 0.000000e+00 : f32
    %29 = vector.broadcast %cst_13 : f32 to vector<1x8xf32>
    %30 = arith.maximumf %28, %29 : vector<1x8xf32>
    %31 = arith.mulf %20, %30 : vector<1x8xf32>
    %32 = arith.addf %31, %21 : vector<1x8xf32>
    %c0_14 = arith.constant 0 : index
    %c0_15 = arith.constant 0 : index
    %33 = vector.load %arg7[%c0_14, %c0_15] : memref<1x8xf32, #tpu.memory_space<vmem>>, vector<1x8xf32>
    tpu.vector_store %arg7[%c0_14, %c0_15], %32 {strides = array<i32>} : memref<1x8xf32, #tpu.memory_space<vmem>>, vector<1x8xf32>,
    return
  }
  func.func @transform_0(%arg0: i32) -> (i32, i32) {
    %c0_i32 = arith.constant 0 : i32
    %c0_i32_0 = arith.constant 0 : i32
    return %arg0, %c0_i32 : i32, i32
  }
  func.func @transform_1(%arg0: i32) -> (i32, i32) {
    %c0_i32 = arith.constant 0 : i32
    %c0_i32_0 = arith.constant 0 : i32
    return %c0_i32, %arg0 : i32, i32
  }
  func.func @transform_2(%arg0: i32) -> (i32, i32) {
    %c0_i32 = arith.constant 0 : i32
    %c0_i32_0 = arith.constant 0 : i32
    %c0_i32_1 = arith.constant 0 : i32
    return %c0_i32, %c0_i32_0 : i32, i32
  }
  func.func @transform_3(%arg0: i32) -> (i32, i32) {
    %c0_i32 = arith.constant 0 : i32
    %c0_i32_0 = arith.constant 0 : i32
    %c0_i32_1 = arith.constant 0 : i32
    return %c0_i32, %c0_i32_0 : i32, i32
  }
  func.func @transform_4(%arg0: i32) -> (i32, i32) {
    %c0_i32 = arith.constant 0 : i32
    %c0_i32_0 = arith.constant 0 : i32
    %c0_i32_1 = arith.constant 0 : i32
    return %c0_i32, %c0_i32_0 : i32, i32
  }
  func.func @transform_5(%arg0: i32) -> (i32, i32) {
    %c0_i32 = arith.constant 0 : i32
    %c0_i32_0 = arith.constant 0 : i32
    %c0_i32_1 = arith.constant 0 : i32
    return %c0_i32, %c0_i32_0 : i32, i32
  }
  func.func @transform_6(%arg0: i32) -> (i32, i32) {
    %c0_i32 = arith.constant 0 : i32
    %c0_i32_0 = arith.constant 0 : i32
    return %c0_i32, %arg0 : i32, i32
  }
}

</mosaic_0001>

<llo_original>
// kernel: qmix_forward.1
$region0: #{qmix_forward.1}
  #allocation0 [shape = 'u32[]', space=smem, size = 0x4, offset = 0x4, fixed_abs, tag = 'smem constant byte address 0x4 - core index']
  #allocation1 [shape = 'u32[144,128]{1,0:T(1,128)}', space=vmem, size = 0x12000, scoped, tag = 'internal scratch']
  %s0 = inlined_call_operand.vmem [shape: f32[8,32], index: 0, kind: input, shape index: {}]
  %s1 = inlined_call_operand.vmem [shape: f32[3,8], index: 1, kind: input, shape index: {}]
  %s2 = inlined_call_operand.vmem [shape: bf16[193,32], index: 2, kind: input, shape index: {}]
  %s3 = inlined_call_operand.vmem [shape: f32[193,1], index: 3, kind: input, shape index: {}]
  %s4 = inlined_call_operand.vmem [shape: bf16[5,193], index: 4, kind: input, shape index: {}]
  %s5 = inlined_call_operand.vmem [shape: f32[5,1], index: 5, kind: input, shape index: {}]
  %s6 = inlined_call_operand.hbm [shape: f32[1,8], index: 6, kind: output, shape index: {}]
  %s7 = sld [smem:[#allocation0]]
  $region34: #{qmix_forward.1} parent=0
    _
  %s9 = ssub.s32 1, %s7
  %s10 = scalar_select 0, %s9, %s7
  $region1: #{qmix_forward.1} parent=0
    #allocation2 [shape = 'u8[512]{0}', space=vmem, size = 0x400, scoped, tag = 'output window, operand 0, single buffered']
    #allocation3 [shape = 's32[1]{0}', space=sflag, size = 0x4, scoped, tag = 'scoped memory for qmix_forward.1']
    %11 = vsyncpa [#allocation3], 0
    // Predicated region
    $region2: #{qmix_forward.1} parent=1 // pred_check
      _
    $region3: #{qmix_forward.1} parent=1 // pred_check_branch
      %13 = sbr.rel (0) target = $region5
    $region4: #{qmix_forward.1} parent=1 // pred_region
      _
    $region5: #{qmix_forward.1} parent=1 // pred_fallthru
      _
    // Predicated region
    $region6: #{qmix_forward.1} parent=1 // pred_check
      _
    $region7: #{qmix_forward.1} parent=1 // pred_check_branch
      %15 = sbr.rel (0) target = $region9
    $region8: #{qmix_forward.1} parent=1 // pred_region
      _
    $region9: #{qmix_forward.1} parent=1 // pred_fallthru
      _
    // Predicated region
    $region10: #{qmix_forward.1} parent=1 // pred_check
      _
    $region11: #{qmix_forward.1} parent=1 // pred_check_branch
      %17 = sbr.rel (0) target = $region13
    $region12: #{qmix_forward.1} parent=1 // pred_region
      _
    $region13: #{qmix_forward.1} parent=1 // pred_fallthru
      _
    // Predicated region
    $region14: #{qmix_forward.1} parent=1 // pred_check
      _
    $region15: #{qmix_forward.1} parent=1 // pred_check_branch
      %19 = sbr.rel (0) target = $region17
    $region16: #{qmix_forward.1} parent=1 // pred_region
      _
    $region17: #{qmix_forward.1} parent=1 // pred_fallthru
      _
    // Predicated region
    $region18: #{qmix_forward.1} parent=1 // pred_check
      _
    $region19: #{qmix_forward.1} parent=1 // pred_check_branch
      %21 = sbr.rel (0) target = $region21
    $region20: #{qmix_forward.1} parent=1 // pred_region
      _
    $region21: #{qmix_forward.1} parent=1 // pred_fallthru
      _
    // Predicated region
    $region22: #{qmix_forward.1} parent=1 // pred_check
      _
    $region23: #{qmix_forward.1} parent=1 // pred_check_branch
      %23 = sbr.rel (0) target = $region25
    $region24: #{qmix_forward.1} parent=1 // pred_region
      _
    $region25: #{qmix_forward.1} parent=1 // pred_fallthru
      _
    %v25 = vld [vmem:[%s0] sm:$0xff]
    %v26 = vpack.c.bf16 %v25, %v25
    %v27 = vld [vmem:[%s1] sm:$0x7]
    %v28 = vld [vmem:[%s2] sm:$0xf]
    %v29 = vld [vmem:[%s2 + $0x4] sm:$0xf]
    %v30 = vld [vmem:[%s2 + $0x8] sm:$0xf]
    %v31 = vld [vmem:[%s2 + $0xc] sm:$0xf]
    %v32 = vld [vmem:[%s2 + $0x10] sm:$0xf]
    %v33 = vld [vmem:[%s2 + $0x14] sm:$0xf]
    %v34 = vld [vmem:[%s2 + $0x18] sm:$0xf]
    %v35 = vld [vmem:[%s2 + $0x1c] sm:$0xf]
    %v36 = vld [vmem:[%s2 + $0x20] sm:$0xf]
    %v37 = vld [vmem:[%s2 + $0x24] sm:$0xf]
    %v38 = vld [vmem:[%s2 + $0x28] sm:$0xf]
    %v39 = vld [vmem:[%s2 + $0x2c] sm:$0xf]
    %v40 = vld [vmem:[%s2 + $0x30] sm:$0xf]
    %v41 = vld [vmem:[%s2 + $0x34] sm:$0xf]
    %v42 = vld [vmem:[%s2 + $0x38] sm:$0xf]
    %v43 = vld [vmem:[%s2 + $0x3c] sm:$0xf]
    %v44 = vld [vmem:[%s2 + $0x40] sm:$0xf]
    %v45 = vld [vmem:[%s2 + $0x44] sm:$0xf]
    %v46 = vld [vmem:[%s2 + $0x48] sm:$0xf]
    %v47 = vld [vmem:[%s2 + $0x4c] sm:$0xf]
    %v48 = vld [vmem:[%s2 + $0x50] sm:$0xf]
    %v49 = vld [vmem:[%s2 + $0x54] sm:$0xf]
    %v50 = vld [vmem:[%s2 + $0x58] sm:$0xf]
    %v51 = vld [vmem:[%s2 + $0x5c] sm:$0xf]
    %v52 = vld [vmem:[%s2 + $0x60] sm:$0x1]
    %v53 = vld [vmem:[%s3] sm:$0xff]
    %v54 = vld [vmem:[%s3 + $0x8] sm:$0xff]
    %v55 = vld [vmem:[%s3 + $0x10] sm:$0xff]
    %v56 = vld [vmem:[%s3 + $0x18] sm:$0xff]
    %v57 = vld [vmem:[%s3 + $0x20] sm:$0xff]
    %v58 = vld [vmem:[%s3 + $0x28] sm:$0xff]
    %v59 = vld [vmem:[%s3 + $0x30] sm:$0xff]
    %v60 = vld [vmem:[%s3 + $0x38] sm:$0xff]
    %v61 = vld [vmem:[%s3 + $0x40] sm:$0xff]
    %v62 = vld [vmem:[%s3 + $0x48] sm:$0xff]
    %v63 = vld [vmem:[%s3 + $0x50] sm:$0xff]
    %v64 = vld [vmem:[%s3 + $0x58] sm:$0xff]
    %v65 = vld [vmem:[%s3 + $0x60] sm:$0xff]
    %v66 = vld [vmem:[%s3 + $0x68] sm:$0xff]
    %v67 = vld [vmem:[%s3 + $0x70] sm:$0xff]
    %v68 = vld [vmem:[%s3 + $0x78] sm:$0xff]
    %v69 = vld [vmem:[%s3 + $0x80] sm:$0xff]
    %v70 = vld [vmem:[%s3 + $0x88] sm:$0xff]
    %v71 = vld [vmem:[%s3 + $0x90] sm:$0xff]
    %v72 = vld [vmem:[%s3 + $0x98] sm:$0xff]
    %v73 = vld [vmem:[%s3 + $0xa0] sm:$0xff]
    %v74 = vld [vmem:[%s3 + $0xa8] sm:$0xff]
    %v75 = vld [vmem:[%s3 + $0xb0] sm:$0xff]
    %v76 = vld [vmem:[%s3 + $0xb8] sm:$0xff]
    %v77 = vld [vmem:[%s3 + $0xc0] sm:$0x1]
    %79 = vset.pattern.permute.xlu0 0
    %80 = vperm.xlu0 %79, %v53
    %v81 = vpop.permute.xlu0 %80
    %84 = vset.pattern.permute.xlu0 0
    %85 = vperm.xlu0 %84, %v54
    %v86 = vpop.permute.xlu0 %85
    %89 = vset.pattern.permute.xlu0 0
    %90 = vperm.xlu0 %89, %v55
    %v91 = vpop.permute.xlu0 %90
    %94 = vset.pattern.permute.xlu0 0
    %95 = vperm.xlu0 %94, %v56
    %v96 = vpop.permute.xlu0 %95
    %99 = vset.pattern.permute.xlu0 0
    %100 = vperm.xlu0 %99, %v57
    %v101 = vpop.permute.xlu0 %100
    %104 = vset.pattern.permute.xlu0 0
    %105 = vperm.xlu0 %104, %v58
    %v106 = vpop.permute.xlu0 %105
    %109 = vset.pattern.permute.xlu0 0
    %110 = vperm.xlu0 %109, %v59
    %v111 = vpop.permute.xlu0 %110
    %114 = vset.pattern.permute.xlu0 0
    %115 = vperm.xlu0 %114, %v60
    %v116 = vpop.permute.xlu0 %115
    %119 = vset.pattern.permute.xlu0 0
    %120 = vperm.xlu0 %119, %v61
    %v121 = vpop.permute.xlu0 %120
    %124 = vset.pattern.permute.xlu0 0
    %125 = vperm.xlu0 %124, %v62
    %v126 = vpop.permute.xlu0 %125
    %129 = vset.pattern.permute.xlu0 0
    %130 = vperm.xlu0 %129, %v63
    %v131 = vpop.permute.xlu0 %130
    %134 = vset.pattern.permute.xlu0 0
    %135 = vperm.xlu0 %134, %v64
    %v136 = vpop.permute.xlu0 %135
    %139 = vset.pattern.permute.xlu0 0
    %140 = vperm.xlu0 %139, %v65
    %v141 = vpop.permute.xlu0 %140
    %144 = vset.pattern.permute.xlu0 0
    %145 = vperm.xlu0 %144, %v66
    %v146 = vpop.permute.xlu0 %145
    %149 = vset.pattern.permute.xlu0 0
    %150 = vperm.xlu0 %149, %v67
    %v151 = vpop.permute.xlu0 %150
    %154 = vset.pattern.permute.xlu0 0
    %155 = vperm.xlu0 %154, %v68
    %v156 = vpop.permute.xlu0 %155
    %159 = vset.pattern.permute.xlu0 0
    %160 = vperm.xlu0 %159, %v69
    %v161 = vpop.permute.xlu0 %160
    %164 = vset.pattern.permute.xlu0 0
    %165 = vperm.xlu0 %164, %v70
    %v166 = vpop.permute.xlu0 %165
    %169 = vset.pattern.permute.xlu0 0
    %170 = vperm.xlu0 %169, %v71
    %v171 = vpop.permute.xlu0 %170
    %174 = vset.pattern.permute.xlu0 0
    %175 = vperm.xlu0 %174, %v72
    %v176 = vpop.permute.xlu0 %175
    %179 = vset.pattern.permute.xlu0 0
    %180 = vperm.xlu0 %179, %v73
    %v181 = vpop.permute.xlu0 %180
    %184 = vset.pattern.permute.xlu0 0
    %185 = vperm.xlu0 %184, %v74
    %v186 = vpop.permute.xlu0 %185
    %189 = vset.pattern.permute.xlu0 0
    %190 = vperm.xlu0 %189, %v75
    %v191 = vpop.permute.xlu0 %190
    %194 = vset.pattern.permute.xlu0 0
    %195 = vperm.xlu0 %194, %v76
    %v196 = vpop.permute.xlu0 %195
    %199 = vset.pattern.permute.xlu0 0
    %200 = vperm.xlu0 %199, %v77
    %v201 = vpop.permute.xlu0 %200
    %v228 = vunpack.c.l.b16 %v28
    %v229 = vunpack.c.l.b16 %v29
    %v230 = vunpack.c.l.b16 %v30
    %v231 = vunpack.c.l.b16 %v31
    %v232 = vunpack.c.l.b16 %v32
    %v233 = vunpack.c.l.b16 %v33
    %v234 = vunpack.c.l.b16 %v34
    %v235 = vunpack.c.l.b16 %v35
    %v236 = vunpack.c.l.b16 %v36
    %v237 = vunpack.c.l.b16 %v37
    %v238 = vunpack.c.l.b16 %v38
    %v239 = vunpack.c.l.b16 %v39
    %v240 = vunpack.c.l.b16 %v40
    %v241 = vunpack.c.l.b16 %v41
    %v242 = vunpack.c.l.b16 %v42
    %v243 = vunpack.c.l.b16 %v43
    %v244 = vunpack.c.l.b16 %v44
    %v245 = vunpack.c.l.b16 %v45
    %v246 = vunpack.c.l.b16 %v46
    %v247 = vunpack.c.l.b16 %v47
    %v248 = vunpack.c.l.b16 %v48
    %v249 = vunpack.c.l.b16 %v49
    %v250 = vunpack.c.l.b16 %v50
    %v251 = vunpack.c.l.b16 %v51
    %v252 = vunpack.c.l.b16 %v52
    %v253 = vpack.c.b16 %v229, %v228
    %v254 = vpack.c.b16 %v231, %v230
    %v255 = vpack.c.b16 %v233, %v232
    %v256 = vpack.c.b16 %v235, %v234
    %v257 = vpack.c.b16 %v237, %v236
    %v258 = vpack.c.b16 %v239, %v238
    %v259 = vpack.c.b16 %v241, %v240
    %v260 = vpack.c.b16 %v243, %v242
    %v261 = vpack.c.b16 %v245, %v244
    %v262 = vpack.c.b16 %v247, %v246
    %v263 = vpack.c.b16 %v249, %v248
    %v264 = vpack.c.b16 %v251, %v250
    %v265 = vpack.c.b16 %v252, %v252
    %vm266 = vcmask 261120
    %v268 = vsel %vm266, %v253, 0
    %v271 = vsel %vm266, %v254, 0
    %v274 = vsel %vm266, %v255, 0
    %v277 = vsel %vm266, %v256, 0
    %v280 = vsel %vm266, %v257, 0
    %v283 = vsel %vm266, %v258, 0
    %v286 = vsel %vm266, %v259, 0
    %v289 = vsel %vm266, %v260, 0
    %v292 = vsel %vm266, %v261, 0
    %v295 = vsel %vm266, %v262, 0
    %v298 = vsel %vm266, %v263, 0
    %v301 = vsel %vm266, %v264, 0
    %v304 = vsel %vm266, %v265, 0
    %v307 = vsel %vm266, %v26, 0
    %309 = vmatprep.subr.bf16.mxu0 0
    %310 = vmatpush1.bf16.xpose.msra.mxu0 0
    %311 = vmatprep.subr.bf16.mxu0 0
    %312 = vmatpush1.bf16.xpose.msra.mxu0 0
    %313 = vmatprep.subr.bf16.mxu0 0
    %314 = vmatpush1.bf16.xpose.msra.mxu0 0
    %315 = vmatprep.subr.bf16.mxu0 0
    %316 = vmatpush1.bf16.xpose.msra.mxu0 0
    %317 = vmatprep.subr.bf16.mxu0 0
    %318 = vmatpush1.bf16.xpose.msra.mxu0 0
    %319 = vmatprep.subr.bf16.mxu0 0
    %320 = vmatpush1.bf16.xpose.msra.mxu0 0
    %321 = vmatprep.subr.bf16.mxu0 0
    %322 = vmatpush1.bf16.xpose.msra.mxu0 0
    %323 = vmatprep.subr.bf16.mxu0 0
    %324 = vmatpush1.bf16.xpose.msra.mxu0 %v307
    %325 = vmatprep.subr.bf16.mxu0 0
    %326 = vmatpush2.bf16.xpose.msra.mxu0 0
    %327 = vmatprep.subr.bf16.mxu0 0
    %328 = vmatpush2.bf16.xpose.msra.mxu0 0
    %329 = vmatprep.subr.bf16.mxu0 0
    %330 = vmatpush2.bf16.xpose.msra.mxu0 0
    %331 = vmatprep.subr.bf16.mxu0 0
    %332 = vmatpush2.bf16.xpose.msra.mxu0 0
    %333 = vmatprep.subr.bf16.mxu0 0
    %334 = vmatpush2.bf16.xpose.msra.mxu0 0
    %335 = vmatprep.subr.bf16.mxu0 0
    %336 = vmatpush2.bf16.xpose.msra.mxu0 0
    %337 = vmatprep.subr.bf16.mxu0 0
    %338 = vmatpush2.bf16.xpose.msra.mxu0 0
    %339 = vmatprep.subr.bf16.mxu0 0
    %340 = vmatpush2.bf16.xpose.msra.mxu0 0
    %341 = vmatprep.mubr.bf16.mxu0 0
    %342 = vmatmul.mubr.bf16.gmra.mxu0 %v268
    %v343 = vpop.f32.mrf.mxu0
    %v344 = vadd.f32 %v81, %v343
    %v345 = vpop.f32.mrf.mxu0
    %v346 = vpop.f32.mrf.mxu0
    %v347 = vadd.f32 %v86, %v346
    %v348 = vpop.f32.mrf.mxu0
    %349 = vmatprep.mubr.bf16.mxu0 0
    %350 = vmatmul.mubr.bf16.gmra.mxu0 %v271
    %v351 = vpop.f32.mrf.mxu0
    %v352 = vadd.f32 %v91, %v351
    %v353 = vpop.f32.mrf.mxu0
    %v354 = vpop.f32.mrf.mxu0
    %v355 = vadd.f32 %v96, %v354
    %v356 = vpop.f32.mrf.mxu0
    %357 = vmatprep.mubr.bf16.mxu0 0
    %358 = vmatmul.mubr.bf16.gmra.mxu0 %v274
    %v359 = vpop.f32.mrf.mxu0
    %v360 = vadd.f32 %v101, %v359
    %v361 = vpop.f32.mrf.mxu0
    %v362 = vpop.f32.mrf.mxu0
    %v363 = vadd.f32 %v106, %v362
    %v364 = vpop.f32.mrf.mxu0
    %365 = vmatprep.mubr.bf16.mxu0 0
    %366 = vmatmul.mubr.bf16.gmra.mxu0 %v277
    %v367 = vpop.f32.mrf.mxu0
    %v368 = vadd.f32 %v111, %v367
    %v369 = vpop.f32.mrf.mxu0
    %v370 = vpop.f32.mrf.mxu0
    %v371 = vadd.f32 %v116, %v370
    %v372 = vpop.f32.mrf.mxu0
    %373 = vmatprep.mubr.bf16.mxu0 0
    %374 = vmatmul.mubr.bf16.gmra.mxu0 %v280
    %v375 = vpop.f32.mrf.mxu0
    %v376 = vadd.f32 %v121, %v375
    %v377 = vpop.f32.mrf.mxu0
    %v378 = vpop.f32.mrf.mxu0
    %v379 = vadd.f32 %v126, %v378
    %v380 = vpop.f32.mrf.mxu0
    %381 = vmatprep.mubr.bf16.mxu0 0
    %382 = vmatmul.mubr.bf16.gmra.mxu0 %v283
    %v383 = vpop.f32.mrf.mxu0
    %v384 = vadd.f32 %v131, %v383
    %v385 = vpop.f32.mrf.mxu0
    %v386 = vpop.f32.mrf.mxu0
    %v387 = vadd.f32 %v136, %v386
    %v388 = vpop.f32.mrf.mxu0
    %389 = vmatprep.mubr.bf16.mxu0 0
    %390 = vmatmul.mubr.bf16.gmra.mxu0 %v286
    %v391 = vpop.f32.mrf.mxu0
    %v392 = vadd.f32 %v141, %v391
    %v393 = vpop.f32.mrf.mxu0
    %v394 = vpop.f32.mrf.mxu0
    %v395 = vadd.f32 %v146, %v394
    %v396 = vpop.f32.mrf.mxu0
    %397 = vmatprep.mubr.bf16.mxu0 0
    %398 = vmatmul.mubr.bf16.gmra.mxu0 %v289
    %v399 = vpop.f32.mrf.mxu0
    %v400 = vadd.f32 %v151, %v399
    %v401 = vpop.f32.mrf.mxu0
    %v402 = vpop.f32.mrf.mxu0
    %v403 = vadd.f32 %v156, %v402
    %v404 = vpop.f32.mrf.mxu0
    %405 = vmatprep.mubr.bf16.mxu0 0
    %406 = vmatmul.mubr.bf16.gmra.mxu0 %v292
    %v407 = vpop.f32.mrf.mxu0
    %v408 = vadd.f32 %v161, %v407
    %v409 = vpop.f32.mrf.mxu0
    %v410 = vpop.f32.mrf.mxu0
    %v411 = vadd.f32 %v166, %v410
    %v412 = vpop.f32.mrf.mxu0
    %413 = vmatprep.mubr.bf16.mxu0 0
    %414 = vmatmul.mubr.bf16.gmra.mxu0 %v295
    %v415 = vpop.f32.mrf.mxu0
    %v416 = vadd.f32 %v171, %v415
    %v417 = vpop.f32.mrf.mxu0
    %v418 = vpop.f32.mrf.mxu0
    %v419 = vadd.f32 %v176, %v418
    %v420 = vpop.f32.mrf.mxu0
    %421 = vmatprep.mubr.bf16.mxu0 0
    %422 = vmatmul.mubr.bf16.gmra.mxu0 %v298
    %v423 = vpop.f32.mrf.mxu0
    %v424 = vadd.f32 %v181, %v423
    %v425 = vpop.f32.mrf.mxu0
    %v426 = vpop.f32.mrf.mxu0
    %v427 = vadd.f32 %v186, %v426
    %v428 = vpop.f32.mrf.mxu0
    %429 = vmatprep.mubr.bf16.mxu0 0
    %430 = vmatmul.mubr.bf16.gmra.mxu0 %v301
    %v431 = vpop.f32.mrf.mxu0
    %v432 = vadd.f32 %v191, %v431
    %v433 = vpop.f32.mrf.mxu0
    %v434 = vpop.f32.mrf.mxu0
    %v435 = vadd.f32 %v196, %v434
    %v436 = vpop.f32.mrf.mxu0
    %437 = vmatprep.mubr.bf16.mxu0 0
    %438 = vmatmul.mubr.bf16.gmra.mxu0 %v304
    %v439 = vpop.f32.mrf.mxu0
    %v440 = vadd.f32 %v201, %v439
    %v441 = vpop.f32.mrf.mxu0
    %v442 = vpop.f32.mrf.mxu0
    %v443 = vpop.f32.mrf.mxu0
    %444 = vdwg.mxu0
    %v445 = vmax.f32 %v344, 0.0
    %v446 = vmax.f32 %v347, 0.0
    %v447 = vmax.f32 %v352, 0.0
    %v448 = vmax.f32 %v355, 0.0
    %v449 = vmax.f32 %v360, 0.0
    %v450 = vmax.f32 %v363, 0.0
    %v451 = vmax.f32 %v368, 0.0
    %v452 = vmax.f32 %v371, 0.0
    %v453 = vmax.f32 %v376, 0.0
    %v454 = vmax.f32 %v379, 0.0
    %v455 = vmax.f32 %v384, 0.0
    %v456 = vmax.f32 %v387, 0.0
    %v457 = vmax.f32 %v392, 0.0
    %v458 = vmax.f32 %v395, 0.0
    %v459 = vmax.f32 %v400, 0.0
    %v460 = vmax.f32 %v403, 0.0
    %v461 = vmax.f32 %v408, 0.0
    %v462 = vmax.f32 %v411, 0.0
    %v463 = vmax.f32 %v416, 0.0
    %v464 = vmax.f32 %v419, 0.0
    %v465 = vmax.f32 %v424, 0.0
    %v466 = vmax.f32 %v427, 0.0
    %v467 = vmax.f32 %v432, 0.0
    %v468 = vmax.f32 %v435, 0.0
    %v469 = vmax.f32 %v440, 0.0
    %v470 = vpack.c.bf16 %v446, %v445
    %v471 = vpack.c.bf16 %v448, %v447
    %v472 = vpack.c.bf16 %v450, %v449
    %v473 = vpack.c.bf16 %v452, %v451
    %v474 = vpack.c.bf16 %v454, %v453
    %v475 = vpack.c.bf16 %v456, %v455
    %v476 = vpack.c.bf16 %v458, %v457
    %v477 = vpack.c.bf16 %v460, %v459
    %v478 = vpack.c.bf16 %v462, %v461
    %v479 = vpack.c.bf16 %v464, %v463
    %v480 = vpack.c.bf16 %v466, %v465
    %v481 = vpack.c.bf16 %v468, %v467
    %v482 = vpack.c.bf16 %v469, %v469
    %v483 = vld [vmem:[%s4] sm:$0x77]
    %v484 = vld [vmem:[%s5] sm:$0x1f]
    %486 = vset.pattern.permute.xlu0 0
    %487 = vperm.xlu0 %486, %v484
    %v488 = vpop.permute.xlu0 %487
    %v491 = vunpack.c.l.b16 %v483
    %v492 = vunpack.c.h.b16 %v483
    %v493 = vpack.c.b16 %v491, %v491
    %v494 = vpack.c.b16 %v492, %v492
    %vm496 = vcmask 531456
    %v498 = vsel %vm496, %v494, 0
    %vm500 = vcmask 1040384
    %v501 = vsel 0, 4294967295, 65535
    %v502 = vsel %vm500, %v501, 0
    %v504 = vand.u32 %v482, %v502
    %506 = vmatprep.subr.bf16.mxu0 0
    %507 = vmatpush1.bf16.msra.mxu0 %v477
    %508 = vmatprep.subr.bf16.mxu0 0
    %509 = vmatpush1.bf16.msra.mxu0 %v476
    %510 = vmatprep.subr.bf16.mxu0 0
    %511 = vmatpush1.bf16.msra.mxu0 %v475
    %512 = vmatprep.subr.bf16.mxu0 0
    %513 = vmatpush1.bf16.msra.mxu0 %v474
    %514 = vmatprep.subr.bf16.mxu0 0
    %515 = vmatpush1.bf16.msra.mxu0 %v473
    %516 = vmatprep.subr.bf16.mxu0 0
    %517 = vmatpush1.bf16.msra.mxu0 %v472
    %518 = vmatprep.subr.bf16.mxu0 0
    %519 = vmatpush1.bf16.msra.mxu0 %v471
    %520 = vmatprep.subr.bf16.mxu0 0
    %521 = vmatpush1.bf16.msra.mxu0 %v470
    %522 = vmatprep.subr.bf16.mxu0 0
    %523 = vmatpush2.bf16.msra.mxu0 0
    %524 = vmatprep.subr.bf16.mxu0 0
    %525 = vmatpush2.bf16.msra.mxu0 0
    %526 = vmatprep.subr.bf16.mxu0 0
    %527 = vmatpush2.bf16.msra.mxu0 0
    %528 = vmatprep.subr.bf16.mxu0 0
    %529 = vmatpush2.bf16.msra.mxu0 %v504
    %530 = vmatprep.subr.bf16.mxu0 0
    %531 = vmatpush2.bf16.msra.mxu0 %v481
    %532 = vmatprep.subr.bf16.mxu0 0
    %533 = vmatpush2.bf16.msra.mxu0 %v480
    %534 = vmatprep.subr.bf16.mxu0 0
    %535 = vmatpush2.bf16.msra.mxu0 %v479
    %536 = vmatprep.subr.bf16.mxu0 0
    %537 = vmatpush2.bf16.msra.mxu0 %v478
    %538 = vmatprep.mubr.bf16.mxu0 %v498
    %539 = vmatmul.mubr.bf16.gmra.mxu0 %v493
    %v540 = vpop.f32.mrf.mxu0
    %v541 = vadd.f32 %v488, %v540
    %v542 = vpop.f32.mrf.mxu0
    %v543 = vpop.f32.mrf.mxu0
    %v544 = vpop.f32.mrf.mxu0
    %545 = vdwg.mxu0
    %v546 = vand.u32 2147483647, %v541
    %v547 = vmul.f32 %v546, %v27
    %v549 = vrot.slane %v547, 1
    %v551 = vadd.f32 %v547, %v549
    %v552 = vrot.slane %v547, 2
    %v554 = vadd.f32 %v551, %v552
    %v555 = vadd.f32 %v554, %v440
    %v556 = vmax.f32 %v555, 0.0
    %v558 = vrot.slane %v556, 5
    %v560 = vmul.f32 %v546, %v558
    %v562 = vrot.slane %v541, 1
    %v564 = vadd.f32 %v560, %v562
    %vm565 = vcmask 60419
    %566 = vst.msk [vmem:[#allocation2 - $0x3] sm:$0x8] %vm565, %v564
    // Predicated region
    $region26: #{qmix_forward.1} parent=1 // pred_check
      _
    $region27: #{qmix_forward.1} parent=1 // pred_check_branch
      %568 = sbr.rel (0) target = $region29
    $region28: #{qmix_forward.1} parent=1 // pred_region
      %s570 = ssub.s32 16, 16
      %571 = vsyncadd [#allocation3], %s570
      %s573 = sshll.u32 [#allocation2], 4
      %s574 = int_to_ptr.vmem [resolvable:$true] %s573
      %576 = dma.vmem_to_hbm [thread:$0]  %s574, 16, %s6, [#allocation3]
    $region29: #{qmix_forward.1} parent=1 // pred_fallthru
      _
    // Predicated region
    $region30: #{qmix_forward.1} parent=1 // pred_check
      _
    $region31: #{qmix_forward.1} parent=1 // pred_check_branch
      %578 = sbr.rel (0) target = $region33
    $region32: #{qmix_forward.1} parent=1 // pred_region
      %579 = dma.done [#allocation3], 16
    $region33: #{qmix_forward.1} parent=1 // pred_fallthru
      _
    %580 = vsyncpa [#allocation3], 1

</llo_original>
